<compile_context>
chip_gen: v5e
topology: v5e:2x2
jax: 0.10.0
libtpu: 0.0.40
codegen_flags: <defaults>
</compile_context>

<pallas_src>
import functools
import math

import jax
import jax.numpy as jnp
from jax.experimental import pallas as pl
from jax.experimental.pallas import tpu as pltpu


def _glu_kernel(x_ref, w_ref, b_ref, o_ref, *, d):
    # One fused MXU matmul: (rows, D) @ (D, 2D) -> (rows, 2D), f32 accumulation.
    h = jnp.dot(x_ref[...], w_ref[...], preferred_element_type=jnp.float32)
    h = h + b_ref[...]                      # bias broadcast (1, 2D) over rows, f32
    gate = jax.nn.sigmoid(h[:, :d])         # fc1 path (exp on the otherwise-idle EUP)
    val = h[:, d:]                          # fc2 path (lane shift on the idle XLU)
    o_ref[...] = (gate * val).astype(o_ref.dtype)


def _pick_block_rows(n, d, bytes_per_elem):
    """Row-block size.

    Single grid step unless splitting gives every step (and, on v7x, every
    TensorCore) >= 256 rows of real MXU work; large-N blocks are capped by a
    VMEM budget for the double-buffered x/out tiles.
    """
    min_rows_per_step = 256
    if n < 2 * min_rows_per_step:
        return n                              # one grid step: no pipeline overhead
    budget = 8 * 1024 * 1024                  # x+out tiles, 2 buffers each
    for cand in (4096, 2048, 1024, 512, 256):
        if n % cand == 0 and 4 * cand * d * bytes_per_elem <= budget:
            return cand
    return n


def fuse_glu_params(w1, b1, w2, b2):
    """Fuse fc1/fc2 once (at 'module init'), outside the per-forward hot path."""
    D = w1.shape[0]
    w = jnp.concatenate([w1, w2], axis=1)            # (D, 2D): [w1 | w2]
    b = jnp.concatenate([b1, b2]).reshape(1, 2 * D)  # (1, 2D)
    return w, b


def glu(x, w_fused, b_fused, *, block_rows=None, compute_dtype=None):
    """Pallas implementation of GLU.forward(x).

    x:        [..., D]
    w_fused:  [D, 2D]   (= concat of torch fc1.weight.T, fc2.weight.T)
    b_fused:  [1, 2D]
    compute_dtype: dtype for the MXU operands (default x.dtype); pass
        jnp.bfloat16 at non-toy D/N to halve DMA bytes and double MXU rate.
    """
    orig_shape = x.shape
    D = orig_shape[-1]
    assert w_fused.shape == (D, 2 * D) and b_fused.shape == (1, 2 * D)
    N = math.prod(orig_shape[:-1])

    out_dtype = x.dtype
    if compute_dtype is None:
        compute_dtype = x.dtype
    itemsize = jnp.dtype(compute_dtype).itemsize
    out_itemsize = jnp.dtype(out_dtype).itemsize

    x2 = x.reshape(N, D).astype(compute_dtype)
    w = w_fused.astype(compute_dtype)
    b = b_fused.astype(jnp.float32)          # added post-accumulation in f32

    if block_rows is None:
        block_rows = _pick_block_rows(N, D, itemsize)
    assert N % block_rows == 0
    grid_steps = N // block_rows

    cost = pl.CostEstimate(
        flops=2 * N * D * (2 * D),
        transcendentals=N * D,               # one exp per gate element
        bytes_accessed=(N * D * itemsize            # x
                        + 2 * D * D * itemsize      # fused W
                        + 2 * D * 4                 # fused bias
                        + N * D * out_itemsize),    # out
    )

    # Scoped-VMEM estimate: double-buffered x/out tiles + double-buffered W/b.
    vmem_est = (2 * block_rows * D * itemsize
                + 2 * block_rows * D * out_itemsize
                + 2 * (2 * D * D) * itemsize
                + 2 * (2 * D) * 4)
    compiler_kwargs = dict(dimension_semantics=("parallel",))
    if vmem_est > 12 * 1024 * 1024:
        compiler_kwargs["vmem_limit_bytes"] = int(min(2 * vmem_est, 64 * 1024 * 1024))

    kernel = functools.partial(_glu_kernel, d=D)

    out2 = pl.pallas_call(
        kernel,
        out_shape=jax.ShapeDtypeStruct((N, D), out_dtype),
        grid_spec=pltpu.PrefetchScalarGridSpec(
            num_scalar_prefetch=0,
            grid=(grid_steps,),
            in_specs=[
                pl.BlockSpec((block_rows, D), lambda i: (i, 0)),   # x rows
                pl.BlockSpec((D, 2 * D), lambda i: (0, 0)),        # fused W (grid-invariant)
                pl.BlockSpec((1, 2 * D), lambda i: (0, 0)),        # fused bias
            ],
            out_specs=pl.BlockSpec((block_rows, D), lambda i: (i, 0)),
        ),
        compiler_params=pltpu.CompilerParams(**compiler_kwargs),
        cost_estimate=cost,
    )(x2, w, b)

    return out2.reshape(orig_shape)


def glu_ref(x, w1, b1, w2, b2):
    """Pure-JAX reference matching the PyTorch forward."""
    return jax.nn.sigmoid(x @ w1 + b1) * (x @ w2 + b2)


if __name__ == "__main__":
    # Small shapes consistent with the module: batch=2, seq=8, dim_input=32.
    B, S, D = 2, 8, 32

    key = jax.random.PRNGKey(0)
    kx, kw1, kb1, kw2, kb2 = jax.random.split(key, 5)

    x = jax.random.normal(kx, (B, S, D), dtype=jnp.float32)
    # nn.Linear weights stored as [in, out] (== torch weight.T), biases [out].
    w1 = jax.random.normal(kw1, (D, D), dtype=jnp.float32) * 0.1
    b1 = jax.random.normal(kb1, (D,), dtype=jnp.float32) * 0.1
    w2 = jax.random.normal(kw2, (D, D), dtype=jnp.float32) * 0.1
    b2 = jax.random.normal(kb2, (D,), dtype=jnp.float32) * 0.1

    # Fuse once, at "module init" time -- not in the per-forward hot path.
    w_fused, b_fused = jax.block_until_ready(fuse_glu_params(w1, b1, w2, b2))

    out = glu(x, w_fused, b_fused)
    out = jax.block_until_ready(out)

    ref = glu_ref(x, w1, b1, w2, b2)
    assert out.shape == (B, S, D)
    assert out.dtype == x.dtype
    assert jnp.allclose(out, ref, atol=1e-5, rtol=1e-5), "mismatch vs reference"

    print("KERNEL_OK")
</pallas_src>

<mosaic_0001>
module attributes {stable_mosaic.version = 11 : i64} {
  func.func @_glu_kernel(%arg0: i32, %arg1: memref<16x32xf32, #tpu.memory_space<vmem>>, %arg2: memref<32x64xf32, #tpu.memory_space<vmem>>, %arg3: memref<1x64xf32, #tpu.memory_space<vmem>>, %arg4: memref<16x32xf32, #tpu.memory_space<vmem>>) attributes {dimension_semantics = [#tpu.dimension_semantics<parallel>], iteration_bounds = array<i64: 1>, scalar_prefetch = 0 : i64, scratch_operands = 0 : i64, tpu.core_type = #tpu.core_type<tc>, window_params = [{transform_indices = @transform_0, window_bounds = array<i64: 16, 32>}, {pipeline_mode = #tpu.pipeline_mode<synchronous>, transform_indices = @transform_1, window_bounds = array<i64: 32, 64>}, {pipeline_mode = #tpu.pipeline_mode<synchronous>, transform_indices = @transform_2, window_bounds = array<i64: 1, 64>}, {transform_indices = @transform_3, window_bounds = array<i64: 16, 32>}]} {
    %c0 = arith.constant 0 : index
    %c0_0 = arith.constant 0 : index
    %0 = vector.load %arg1[%c0, %c0_0] : memref<16x32xf32, #tpu.memory_space<vmem>>, vector<16x32xf32>
    %c0_1 = arith.constant 0 : index
    %c0_2 = arith.constant 0 : index
    %1 = vector.load %arg2[%c0_1, %c0_2] : memref<32x64xf32, #tpu.memory_space<vmem>>, vector<32x64xf32>
    %cst = arith.constant dense<0.000000e+00> : vector<16x64xf32>
    %2 = tpu.matmul %0, %1, %cst {dimension_numbers = #tpu.dot_dimension_numbers<[1], [0], [0], [1], [0, 0, 1, 1], [], []>} : vector<16x32xf32>, vector<32x64xf32>, vector<16x64xf32> -> vector<16x64xf32>
    %c0_3 = arith.constant 0 : index
    %c0_4 = arith.constant 0 : index
    %3 = vector.load %arg3[%c0_3, %c0_4] : memref<1x64xf32, #tpu.memory_space<vmem>>, vector<1x64xf32>
    %4 = vector.broadcast %3 : vector<1x64xf32> to vector<16x64xf32>
    %5 = arith.addf %2, %4 : vector<16x64xf32>
    %6 = vector.extract_strided_slice %5 {offsets = [0, 0], sizes = [16, 32], strides = [1, 1]} : vector<16x64xf32> to vector<16x32xf32>
    %7 = arith.negf %6 : vector<16x32xf32>
    %8 = math.exp %7 : vector<16x32xf32>
    %cst_5 = arith.constant 1.000000e+00 : f32
    %9 = vector.broadcast %cst_5 : f32 to vector<16x32xf32>
    %10 = arith.addf %9, %8 : vector<16x32xf32>
    %11 = arith.divf %9, %10 : vector<16x32xf32>
    %12 = vector.extract_strided_slice %5 {offsets = [0, 32], sizes = [16, 32], strides = [1, 1]} : vector<16x64xf32> to vector<16x32xf32>
    %13 = arith.mulf %11, %12 : vector<16x32xf32>
    %c0_6 = arith.constant 0 : index
    %c0_7 = arith.constant 0 : index
    %14 = vector.load %arg4[%c0_6, %c0_7] : memref<16x32xf32, #tpu.memory_space<vmem>>, vector<16x32xf32>
    tpu.vector_store %arg4[%c0_6, %c0_7], %13 {strides = array<i32>} : memref<16x32xf32, #tpu.memory_space<vmem>>, vector<16x32xf32>,
    return
  }
  func.func @transform_0(%arg0: i32) -> (i32, i32) {
    %c0_i32 = arith.constant 0 : i32
    %c0_i32_0 = arith.constant 0 : i32
    return %arg0, %c0_i32 : i32, i32
  }
  func.func @transform_1(%arg0: i32) -> (i32, i32) {
    %c0_i32 = arith.constant 0 : i32
    %c0_i32_0 = arith.constant 0 : i32
    %c0_i32_1 = arith.constant 0 : i32
    return %c0_i32, %c0_i32_0 : i32, i32
  }
  func.func @transform_2(%arg0: i32) -> (i32, i32) {
    %c0_i32 = arith.constant 0 : i32
    %c0_i32_0 = arith.constant 0 : i32
    %c0_i32_1 = arith.constant 0 : i32
    return %c0_i32, %c0_i32_0 : i32, i32
  }
  func.func @transform_3(%arg0: i32) -> (i32, i32) {
    %c0_i32 = arith.constant 0 : i32
    %c0_i32_0 = arith.constant 0 : i32
    return %arg0, %c0_i32 : i32, i32
  }
}

</mosaic_0001>

<llo_original>
// kernel: tpu_custom_call.1
$region0: #{tpu_custom_call.1}
  #allocation0 [shape = 'u32[]', space=smem, size = 0x4, offset = 0x4, fixed_abs, tag = 'smem constant byte address 0x4 - core index']
  #allocation1 [shape = 'u32[72,128]{1,0:T(1,128)}', space=vmem, size = 0x9000, scoped, tag = 'internal scratch']
  %s0 = inlined_call_operand.hbm [shape: f32[16,32], index: 0, kind: input, shape index: {}]
  %s1 = inlined_call_operand.hbm [shape: f32[32,64], index: 1, kind: input, shape index: {}]
  %s2 = inlined_call_operand.vmem [shape: f32[1,64], index: 2, kind: input, shape index: {}]
  %s3 = inlined_call_operand.hbm [shape: f32[16,32], index: 3, kind: output, shape index: {}]
  %s4 = sld [smem:[#allocation0]]
  $region30: #{tpu_custom_call.1} parent=0
    _
  %s6 = ssub.s32 1, %s4
  %s7 = scalar_select 0, %s6, %s4
  $region1: #{tpu_custom_call.1} parent=0
    #allocation2 [shape = 'u8[8192]{0}', space=vmem, size = 0x2000, scoped, tag = 'input window, operand 0, single buffered']
    #allocation3 [shape = 's32[1]{0}', space=sflag, size = 0x4, scoped, tag = 'scoped memory for tpu_custom_call.1']
    #allocation4 [shape = 's32[1]{0}', space=sflag, size = 0x4, scoped, tag = 'scoped memory for tpu_custom_call.1']
    #allocation5 [shape = 'u8[16384]{0}', space=vmem, size = 0x4000, scoped, tag = 'input window, operand 1, single buffered']
    #allocation6 [shape = 's32[1]{0}', space=sflag, size = 0x4, scoped, tag = 'scoped memory for tpu_custom_call.1']
    #allocation7 [shape = 'u8[8192]{0}', space=vmem, size = 0x2000, scoped, tag = 'output window, operand 0, single buffered']
    %8 = vsyncpa [#allocation3], 0
    %9 = vsyncpa [#allocation6], 0
    %10 = vsyncpa [#allocation4], 0
    // Predicated region
    $region2: #{tpu_custom_call.1} parent=1 // pred_check
      _
    $region3: #{tpu_custom_call.1} parent=1 // pred_check_branch
      %12 = sbr.rel (0) target = $region5
    $region4: #{tpu_custom_call.1} parent=1 // pred_region
      %14 = vsyncadd [#allocation3], 0
      %s15 = sshll.u32 %s0, 4
      %s16 = int_to_ptr.hbm [resolvable:$true] %s15
      %s17 = sshll.u32 [#allocation2], 4
      %s18 = int_to_ptr.vmem [resolvable:$true] %s17
      %23 = dma.hbm_to_vmem [thread:$0]  %s16, 256, %s18, [#allocation3], 128, 128, 8
    $region5: #{tpu_custom_call.1} parent=1 // pred_fallthru
      _
    // Predicated region
    $region6: #{tpu_custom_call.1} parent=1 // pred_check
      _
    $region7: #{tpu_custom_call.1} parent=1 // pred_check_branch
      %25 = sbr.rel (0) target = $region9
    $region8: #{tpu_custom_call.1} parent=1 // pred_region
      %27 = vsyncadd [#allocation6], 0
      %s28 = sshll.u32 %s1, 4
      %s29 = int_to_ptr.hbm [resolvable:$true] %s28
      %s30 = sshll.u32 [#allocation5], 4
      %s31 = int_to_ptr.vmem [resolvable:$true] %s30
      %36 = dma.hbm_to_vmem [thread:$0]  %s29, 512, %s31, [#allocation6], 128, 128, 8
    $region9: #{tpu_custom_call.1} parent=1 // pred_fallthru
      _
    // Predicated region
    $region10: #{tpu_custom_call.1} parent=1 // pred_check
      _
    $region11: #{tpu_custom_call.1} parent=1 // pred_check_branch
      %38 = sbr.rel (0) target = $region13
    $region12: #{tpu_custom_call.1} parent=1 // pred_region
      _
    $region13: #{tpu_custom_call.1} parent=1 // pred_fallthru
      _
    // Predicated region
    $region14: #{tpu_custom_call.1} parent=1 // pred_check
      _
    $region15: #{tpu_custom_call.1} parent=1 // pred_check_branch
      %40 = sbr.rel (0) target = $region17
    $region16: #{tpu_custom_call.1} parent=1 // pred_region
      %42 = dma.done [#allocation3], 256
    $region17: #{tpu_custom_call.1} parent=1 // pred_fallthru
      _
    // Predicated region
    $region18: #{tpu_custom_call.1} parent=1 // pred_check
      _
    $region19: #{tpu_custom_call.1} parent=1 // pred_check_branch
      %44 = sbr.rel (0) target = $region21
    $region20: #{tpu_custom_call.1} parent=1 // pred_region
      %46 = dma.done [#allocation6], 512
    $region21: #{tpu_custom_call.1} parent=1 // pred_fallthru
      _
    %v47 = vld [vmem:[#allocation2] sm:$0xff]
    %v48 = vld [vmem:[#allocation2 + $0x8] sm:$0xff]
    %v49 = vld [vmem:[#allocation5] sm:$0xff]
    %v50 = vld [vmem:[#allocation5 + $0x8] sm:$0xff]
    %v51 = vld [vmem:[#allocation5 + $0x10] sm:$0xff]
    %v52 = vld [vmem:[#allocation5 + $0x18] sm:$0xff]
    %v53 = vld [vmem:[%s2] sm:$0x1]
    %v55 = vperm.slane %v53, 0
    %vm57 = vcmask 261120
    %v59 = vsel %vm57, %v47, 0
    %v62 = vsel %vm57, %v48, 0
    %64 = vmatpush.msra.mxu0 0.0
    %65 = vmatpush.msra.mxu0 0.0
    %66 = vmatpush.msra.mxu0 0.0
    %67 = vmatpush.msra.mxu0 0.0
    %68 = vmatpush.msra.mxu0 0.0
    %69 = vmatpush.msra.mxu0 0.0
    %70 = vmatpush.msra.mxu0 0.0
    %71 = vmatpush.msra.mxu0 0.0
    %72 = vmatpush.msra.mxu0 0.0
    %73 = vmatpush.msra.mxu0 0.0
    %74 = vmatpush.msra.mxu0 0.0
    %75 = vmatpush.msra.mxu0 0.0
    %76 = vmatpush.msra.mxu0 %v52
    %77 = vmatpush.msra.mxu0 %v51
    %78 = vmatpush.msra.mxu0 %v50
    %79 = vmatpush.msra.mxu0 %v49
    %80 = vmatmul.f32.gmra.mxu0 %v59
    %v81 = vpop.f32.mrf.mxu0
    %v82 = vadd.f32 %v55, %v81
    %83 = vmatmul.f32.gmra.mxu0 %v62
    %v84 = vpop.f32.mrf.mxu0
    %v85 = vadd.f32 %v55, %v84
    %86 = vdwg.mxu0
    %v87 = vxor.u32 %v82, 2147483648
    %v88 = vxor.u32 %v85, 2147483648
    %v89 = vmul.f32 %v87, 1.442695
    %v90 = vpow.pop %v89
    %v91 = vmul.f32 %v88, 1.442695
    %v92 = vpow.pop %v91
    %v93 = vadd.f32 %v90, 1.0
    %v94 = vadd.f32 %v92, 1.0
    %v95 = vrcp.pop %v93
    %v96 = vmul.f32 %v93, %v95
    %v97 = vsub.f32 1.0, %v96
    %v98 = vmul.f32 %v95, %v97
    %v99 = vadd.f32 %v95, %v98
    %vm100 = vweird.f32 %v93
    %vm101 = vweird.f32 %v95
    %vm102 = vmor %vm100, %vm101
    %v103 = vsel %vm102, %v95, %v99
    %v104 = vand.u32 2147483647, %v93
    %vm105 = vcmp.eq.f32.partialorder %v104, 8.507059e+37
    %v106 = vand.u32 %v93, 2147483648
    %v107 = vor.u32 1.1754944e-38, %v106
    %v108 = vsel %vm105, %v107, %v103
    %v109 = vmul.f32 1.0, %v108
    %v110 = vrcp.pop %v94
    %v111 = vmul.f32 %v94, %v110
    %v112 = vsub.f32 1.0, %v111
    %v113 = vmul.f32 %v110, %v112
    %v114 = vadd.f32 %v110, %v113
    %vm115 = vweird.f32 %v94
    %vm116 = vweird.f32 %v110
    %vm117 = vmor %vm115, %vm116
    %v118 = vsel %vm117, %v110, %v114
    %v119 = vand.u32 2147483647, %v94
    %vm120 = vcmp.eq.f32.partialorder %v119, 8.507059e+37
    %v121 = vand.u32 %v94, 2147483648
    %v122 = vor.u32 1.1754944e-38, %v121
    %v123 = vsel %vm120, %v122, %v118
    %v124 = vmul.f32 1.0, %v123
    %127 = vrot.lane.b32.xlu0 %v82, 96
    %v128 = vpop.permute.xlu0 %127
    %129 = vrot.lane.b32.xlu0 %v85, 96
    %v130 = vpop.permute.xlu0 %129
    %v133 = vmul.f32 %v109, %v128
    %v134 = vmul.f32 %v124, %v130
    %135 = vst.msk [vmem:[#allocation7] sm:$0xff] %vm57, %v133
    %136 = vst.msk [vmem:[#allocation7 + $0x8] sm:$0xff] %vm57, %v134
    // Predicated region
    $region22: #{tpu_custom_call.1} parent=1 // pred_check
      _
    $region23: #{tpu_custom_call.1} parent=1 // pred_check_branch
      %138 = sbr.rel (0) target = $region25
    $region24: #{tpu_custom_call.1} parent=1 // pred_region
      %140 = vsyncadd [#allocation4], 0
      %s141 = sshll.u32 [#allocation7], 4
      %s142 = int_to_ptr.vmem [resolvable:$true] %s141
      %s143 = sshll.u32 %s3, 4
      %s144 = int_to_ptr.hbm [resolvable:$true] %s143
      %149 = dma.vmem_to_hbm [thread:$0]  %s142, 256, %s144, [#allocation4], 128, 128, 8
    $region25: #{tpu_custom_call.1} parent=1 // pred_fallthru
      _
    // Predicated region
    $region26: #{tpu_custom_call.1} parent=1 // pred_check
      _
    $region27: #{tpu_custom_call.1} parent=1 // pred_check_branch
      %151 = sbr.rel (0) target = $region29
    $region28: #{tpu_custom_call.1} parent=1 // pred_region
      %153 = dma.done [#allocation4], 256
    $region29: #{tpu_custom_call.1} parent=1 // pred_fallthru
      _
    %154 = vsyncpa [#allocation3], 1
    %155 = vsyncpa [#allocation6], 1
    %156 = vsyncpa [#allocation4], 1

</llo_original>
